<compile_context>
chip_gen: v7x
topology: tpu7x:2x2x1
jax: 0.10.0
libtpu: 0.0.40
codegen_flags: <defaults>
</compile_context>

<pallas_src>
import jax
import jax.numpy as jnp
from jax import lax
from jax.experimental import pallas as pl
from jax.experimental.pallas import tpu as pltpu


def _round_up(n, m):
    return ((n + m - 1) // m) * m


def _make_kernel(compute_dtype):
    def kernel(x_ref, w1_ref, b1_ref, w2_ref, b2_ref, o_ref):
        x = x_ref[...]                                    # (TB, D), x's dtype
        if compute_dtype is not None and x.dtype != compute_dtype:
            x = x.astype(compute_dtype)                   # narrow on the VPU (free slot)

        # Encoder: Linear(input -> hidden) + ReLU.
        # W1 is (H, D) PyTorch layout; contract x's feature dim (1) against
        # W1's `in` dim (1) -- the transpose is folded into the MXU matmul.
        h = lax.dot_general(
            x, w1_ref[...],
            dimension_numbers=(((1,), (1,)), ((), ())),
            preferred_element_type=jnp.float32)           # (TB, H) f32 accumulator
        h = jnp.maximum(h + b1_ref[...], 0.0)             # bias + ReLU in f32

        # Decoder: Linear(hidden -> input) + ReLU.
        # W2 is (D, H); contract h's hidden dim (1) against W2's `in` dim (1).
        y = lax.dot_general(
            h.astype(w2_ref.dtype), w2_ref[...],
            dimension_numbers=(((1,), (1,)), ((), ())),
            preferred_element_type=jnp.float32)           # (TB, D) f32 accumulator
        y = jnp.maximum(y + b2_ref[...], 0.0)             # bias + ReLU in f32

        o_ref[...] = y.astype(o_ref.dtype)                # narrow only at the store

    return kernel


def autoencoder_forward(x, w1, b1, w2, b2, *, compute_dtype=None):
    """x: (B, input_size); w1: (hidden, input); b1: (hidden,);
       w2: (input, hidden); b2: (input,).  Returns (B, input_size) in x.dtype.

    compute_dtype: optional dtype for the matmul operands (e.g. jnp.bfloat16 on
    v6e/v7x).  Accumulation and elementwise math stay in float32."""
    out_dtype = x.dtype
    B, D = x.shape
    H = w1.shape[0]
    assert w1.shape == (H, D) and w2.shape == (D, H)
    assert b1.shape == (H,) and b2.shape == (D,)

    cd = compute_dtype
    w1_c = w1.astype(cd) if cd is not None else w1        # (H, D) -- no transpose
    w2_c = w2.astype(cd) if cd is not None else w2        # (D, H) -- no transpose
    b1_2d = b1.reshape(1, H).astype(jnp.float32)
    b2_2d = b2.reshape(1, D).astype(jnp.float32)

    # --- Batch tile selection ---
    # VMEM budget for the pipelined x/out tiles: 4 buffers (x + out, double
    # buffered) of TB*D*itemsize <= ~8 MiB.  At D=128 f32 that is TB <= 4096,
    # comfortably inside even v5e's 16 MiB scoped-VMEM default (weights/biases
    # at H=32 are a few tens of KiB and stay resident).
    itemsize = jnp.dtype(x.dtype).itemsize
    vmem_budget = 8 << 20
    tb_cap = max(8, (vmem_budget // (4 * D * itemsize)) // 8 * 8)

    if B <= 8:
        TB = B                                            # full-dim block (tiny batches)
    else:
        # Ensure >=4 grid steps at moderate/large B so v7x's two TensorCores
        # both get work and each core keeps its pipeline busy.
        TB = max(8, min(tb_cap, _round_up(pl.cdiv(B, 4), 8)))

    grid = (pl.cdiv(B, TB),)                              # partial edge block is masked

    out = pl.pallas_call(
        _make_kernel(cd),
        out_shape=jax.ShapeDtypeStruct((B, D), out_dtype),
        grid_spec=pltpu.PrefetchScalarGridSpec(
            num_scalar_prefetch=0,
            grid=grid,
            in_specs=[
                pl.BlockSpec((TB, D), lambda i: (i, 0)),   # x: tiled over batch
                pl.BlockSpec((H, D), lambda i: (0, 0)),    # W1: resident, full
                pl.BlockSpec((1, H), lambda i: (0, 0)),    # b1: resident, full
                pl.BlockSpec((D, H), lambda i: (0, 0)),    # W2: resident, full
                pl.BlockSpec((1, D), lambda i: (0, 0)),    # b2: resident, full
            ],
            out_specs=pl.BlockSpec((TB, D), lambda i: (i, 0)),
        ),
        compiler_params=pltpu.CompilerParams(
            # Batch tiles are independent -> lets v7x's 2 TensorCores split them.
            dimension_semantics=("parallel",),
        ),
    )(x, w1_c, b1_2d, w2_c, b2_2d)

    return out


def _reference(x, w1, b1, w2, b2):
    h = jnp.maximum(x @ w1.T + b1, 0.0)
    return jnp.maximum(h @ w2.T + b2, 0.0)


if __name__ == "__main__":
    # Small shapes consistent with the module: input_size=128, hidden_size=32, batch=8.
    # NOTE: at these tiny shapes the kernel is launch/DMA-overhead bound; for real
    # small-batch use, fuse the autoencoder into the surrounding kernel or batch
    # multiple forward calls -- no in-kernel tuning matters at B=8.
    B, D, H = 8, 128, 32

    key = jax.random.PRNGKey(0)
    kx, k1, k2, k3, k4 = jax.random.split(key, 5)

    x = jax.random.normal(kx, (B, D), dtype=jnp.float32)

    # PyTorch Linear parameter shapes: weight (out, in), bias (out,).
    w1 = jax.random.normal(k1, (H, D), dtype=jnp.float32) * 0.1
    b1 = jax.random.normal(k2, (H,), dtype=jnp.float32) * 0.1
    w2 = jax.random.normal(k3, (D, H), dtype=jnp.float32) * 0.1
    b2 = jax.random.normal(k4, (D,), dtype=jnp.float32) * 0.1

    ref = _reference(x, w1, b1, w2, b2)

    # 1) f32 path (default): tight tolerance vs reference.
    out = jax.block_until_ready(autoencoder_forward(x, w1, b1, w2, b2))
    assert out.shape == (B, D)
    assert jnp.allclose(out, ref, atol=1e-4, rtol=1e-4), "f32 mismatch vs reference"

    # 2) bf16 compute path (v6e/v7x fast path): f32 accumulation, looser tolerance.
    out_bf16 = jax.block_until_ready(
        autoencoder_forward(x, w1, b1, w2, b2, compute_dtype=jnp.bfloat16))
    assert out_bf16.shape == (B, D) and out_bf16.dtype == x.dtype
    assert jnp.allclose(out_bf16, ref, atol=1e-1, rtol=1e-1), "bf16 mismatch vs reference"

    # 3) Batch not a multiple of the tile -> exercises the masked partial edge block.
    B2 = 20
    x2 = jax.random.normal(kx, (B2, D), dtype=jnp.float32)
    out2 = jax.block_until_ready(autoencoder_forward(x2, w1, b1, w2, b2))
    assert out2.shape == (B2, D)
    assert jnp.allclose(out2, _reference(x2, w1, b1, w2, b2), atol=1e-4, rtol=1e-4), \
        "partial-edge-block mismatch vs reference"

    # 4) Multi-tile grid (grid >= 4 steps) with a ragged tail.
    B3 = 300
    x3 = jax.random.normal(kx, (B3, D), dtype=jnp.float32)
    out3 = jax.block_until_ready(autoencoder_forward(x3, w1, b1, w2, b2))
    assert out3.shape == (B3, D)
    assert jnp.allclose(out3, _reference(x3, w1, b1, w2, b2), atol=1e-4, rtol=1e-4), \
        "multi-tile mismatch vs reference"

    print("KERNEL_OK")
</pallas_src>

<mosaic_0001>
module attributes {stable_mosaic.version = 11 : i64} {
  func.func @kernel(%arg0: i32, %arg1: memref<8x128xf32, #tpu.memory_space<vmem>>, %arg2: memref<32x128xf32, #tpu.memory_space<vmem>>, %arg3: memref<1x32xf32, #tpu.memory_space<vmem>>, %arg4: memref<128x32xf32, #tpu.memory_space<vmem>>, %arg5: memref<1x128xf32, #tpu.memory_space<vmem>>, %arg6: memref<8x128xf32, #tpu.memory_space<vmem>>) attributes {dimension_semantics = [#tpu.dimension_semantics<parallel>], iteration_bounds = array<i64: 1>, scalar_prefetch = 0 : i64, scratch_operands = 0 : i64, tpu.core_type = #tpu.core_type<tc>, window_params = [{transform_indices = @transform_0, window_bounds = array<i64: 8, 128>}, {pipeline_mode = #tpu.pipeline_mode<synchronous>, transform_indices = @transform_1, window_bounds = array<i64: 32, 128>}, {pipeline_mode = #tpu.pipeline_mode<synchronous>, transform_indices = @transform_2, window_bounds = array<i64: 1, 32>}, {pipeline_mode = #tpu.pipeline_mode<synchronous>, transform_indices = @transform_3, window_bounds = array<i64: 128, 32>}, {pipeline_mode = #tpu.pipeline_mode<synchronous>, transform_indices = @transform_4, window_bounds = array<i64: 1, 128>}, {transform_indices = @transform_5, window_bounds = array<i64: 8, 128>}]} {
    %c0 = arith.constant 0 : index
    %c0_0 = arith.constant 0 : index
    %0 = vector.load %arg1[%c0, %c0_0] : memref<8x128xf32, #tpu.memory_space<vmem>>, vector<8x128xf32>
    %c0_1 = arith.constant 0 : index
    %c0_2 = arith.constant 0 : index
    %1 = vector.load %arg2[%c0_1, %c0_2] : memref<32x128xf32, #tpu.memory_space<vmem>>, vector<32x128xf32>
    %cst = arith.constant dense<0.000000e+00> : vector<8x32xf32>
    %2 = tpu.matmul %0, %1, %cst {dimension_numbers = #tpu.dot_dimension_numbers<[1], [1], [0], [0], [0, 0, 1, 0], [], []>} : vector<8x128xf32>, vector<32x128xf32>, vector<8x32xf32> -> vector<8x32xf32>
    %c0_3 = arith.constant 0 : index
    %c0_4 = arith.constant 0 : index
    %3 = vector.load %arg3[%c0_3, %c0_4] : memref<1x32xf32, #tpu.memory_space<vmem>>, vector<1x32xf32>
    %4 = vector.broadcast %3 : vector<1x32xf32> to vector<8x32xf32>
    %5 = arith.addf %2, %4 : vector<8x32xf32>
    %cst_5 = arith.constant 0.000000e+00 : f32
    %6 = vector.broadcast %cst_5 : f32 to vector<8x32xf32>
    %7 = arith.maximumf %5, %6 : vector<8x32xf32>
    %c0_6 = arith.constant 0 : index
    %c0_7 = arith.constant 0 : index
    %8 = vector.load %arg4[%c0_6, %c0_7] : memref<128x32xf32, #tpu.memory_space<vmem>>, vector<128x32xf32>
    %cst_8 = arith.constant dense<0.000000e+00> : vector<8x128xf32>
    %9 = tpu.matmul %7, %8, %cst_8 {dimension_numbers = #tpu.dot_dimension_numbers<[1], [1], [0], [0], [0, 0, 1, 0], [], []>} : vector<8x32xf32>, vector<128x32xf32>, vector<8x128xf32> -> vector<8x128xf32>
    %c0_9 = arith.constant 0 : index
    %c0_10 = arith.constant 0 : index
    %10 = vector.load %arg5[%c0_9, %c0_10] : memref<1x128xf32, #tpu.memory_space<vmem>>, vector<1x128xf32>
    %11 = vector.broadcast %10 : vector<1x128xf32> to vector<8x128xf32>
    %12 = arith.addf %9, %11 : vector<8x128xf32>
    %cst_11 = arith.constant 0.000000e+00 : f32
    %13 = vector.broadcast %cst_11 : f32 to vector<8x128xf32>
    %14 = arith.maximumf %12, %13 : vector<8x128xf32>
    %c0_12 = arith.constant 0 : index
    %c0_13 = arith.constant 0 : index
    %15 = vector.load %arg6[%c0_12, %c0_13] : memref<8x128xf32, #tpu.memory_space<vmem>>, vector<8x128xf32>
    tpu.vector_store %arg6[%c0_12, %c0_13], %14 {strides = array<i32>} : memref<8x128xf32, #tpu.memory_space<vmem>>, vector<8x128xf32>,
    return
  }
  func.func @transform_0(%arg0: i32) -> (i32, i32) {
    %c0_i32 = arith.constant 0 : i32
    %c0_i32_0 = arith.constant 0 : i32
    return %arg0, %c0_i32 : i32, i32
  }
  func.func @transform_1(%arg0: i32) -> (i32, i32) {
    %c0_i32 = arith.constant 0 : i32
    %c0_i32_0 = arith.constant 0 : i32
    %c0_i32_1 = arith.constant 0 : i32
    return %c0_i32, %c0_i32_0 : i32, i32
  }
  func.func @transform_2(%arg0: i32) -> (i32, i32) {
    %c0_i32 = arith.constant 0 : i32
    %c0_i32_0 = arith.constant 0 : i32
    %c0_i32_1 = arith.constant 0 : i32
    return %c0_i32, %c0_i32_0 : i32, i32
  }
  func.func @transform_3(%arg0: i32) -> (i32, i32) {
    %c0_i32 = arith.constant 0 : i32
    %c0_i32_0 = arith.constant 0 : i32
    %c0_i32_1 = arith.constant 0 : i32
    return %c0_i32, %c0_i32_0 : i32, i32
  }
  func.func @transform_4(%arg0: i32) -> (i32, i32) {
    %c0_i32 = arith.constant 0 : i32
    %c0_i32_0 = arith.constant 0 : i32
    %c0_i32_1 = arith.constant 0 : i32
    return %c0_i32, %c0_i32_0 : i32, i32
  }
  func.func @transform_5(%arg0: i32) -> (i32, i32) {
    %c0_i32 = arith.constant 0 : i32
    %c0_i32_0 = arith.constant 0 : i32
    return %arg0, %c0_i32 : i32, i32
  }
}

</mosaic_0001>

<llo_original>
// kernel: tpu_custom_call.1
$region0: #{tpu_custom_call.1}
  #allocation0 [shape = 'u32[]', space=smem, size = 0x4, offset = 0x4, fixed_abs, tag = 'smem constant byte address 0x4 - core index']
  #allocation1 [shape = 'u32[144,128]{1,0:T(1,128)}', space=vmem, size = 0x12000, scoped, tag = 'internal scratch']
  %s0 = inlined_call_operand.vmem [shape: f32[8,128], index: 0, kind: input, shape index: {}]
  %s1 = inlined_call_operand.vmem [shape: f32[32,128], index: 1, kind: input, shape index: {}]
  %s2 = inlined_call_operand.vmem [shape: f32[1,32], index: 2, kind: input, shape index: {}]
  %s3 = inlined_call_operand.vmem [shape: f32[128,32], index: 3, kind: input, shape index: {}]
  %s4 = inlined_call_operand.vmem [shape: f32[1,128], index: 4, kind: input, shape index: {}]
  %s5 = inlined_call_operand.hbm [shape: f32[8,128], index: 5, kind: output, shape index: {}]
  %s6 = sld [smem:[#allocation0]]
  $region30: #{tpu_custom_call.1} parent=0
    _
  %s8 = ssub.s32 1, %s6
  %s9 = scalar_select 0, %s8, %s6
  $region1: #{tpu_custom_call.1} parent=0
    #allocation2 [shape = 'u8[4096]{0}', space=vmem, size = 0x1000, scoped, tag = 'output window, operand 0, single buffered']
    #allocation3 [shape = 's32[1]{0}', space=sflag, size = 0x4, scoped, tag = 'scoped memory for tpu_custom_call.1']
    %10 = vsyncpa [#allocation3], 0
    // Predicated region
    $region2: #{tpu_custom_call.1} parent=1 // pred_check
      _
    $region3: #{tpu_custom_call.1} parent=1 // pred_check_branch
      %12 = sbr.rel (0) target = $region5
    $region4: #{tpu_custom_call.1} parent=1 // pred_region
      _
    $region5: #{tpu_custom_call.1} parent=1 // pred_fallthru
      _
    // Predicated region
    $region6: #{tpu_custom_call.1} parent=1 // pred_check
      _
    $region7: #{tpu_custom_call.1} parent=1 // pred_check_branch
      %14 = sbr.rel (0) target = $region9
    $region8: #{tpu_custom_call.1} parent=1 // pred_region
      _
    $region9: #{tpu_custom_call.1} parent=1 // pred_fallthru
      _
    // Predicated region
    $region10: #{tpu_custom_call.1} parent=1 // pred_check
      _
    $region11: #{tpu_custom_call.1} parent=1 // pred_check_branch
      %16 = sbr.rel (0) target = $region13
    $region12: #{tpu_custom_call.1} parent=1 // pred_region
      _
    $region13: #{tpu_custom_call.1} parent=1 // pred_fallthru
      _
    // Predicated region
    $region14: #{tpu_custom_call.1} parent=1 // pred_check
      _
    $region15: #{tpu_custom_call.1} parent=1 // pred_check_branch
      %18 = sbr.rel (0) target = $region17
    $region16: #{tpu_custom_call.1} parent=1 // pred_region
      _
    $region17: #{tpu_custom_call.1} parent=1 // pred_fallthru
      _
    // Predicated region
    $region18: #{tpu_custom_call.1} parent=1 // pred_check
      _
    $region19: #{tpu_custom_call.1} parent=1 // pred_check_branch
      %20 = sbr.rel (0) target = $region21
    $region20: #{tpu_custom_call.1} parent=1 // pred_region
      _
    $region21: #{tpu_custom_call.1} parent=1 // pred_fallthru
      _
    %v21 = vld [vmem:[%s0] sm:$0xff]
    %v22 = vld [vmem:[%s1] sm:$0xff]
    %v23 = vld [vmem:[%s1 + $0x8] sm:$0xff]
    %v24 = vld [vmem:[%s1 + $0x10] sm:$0xff]
    %v25 = vld [vmem:[%s1 + $0x18] sm:$0xff]
    %v26 = vld [vmem:[%s2] sm:$0x1]
    %v28 = vlaneseq
    %v29 = vshrl.u32 %v28, 7
    %v30 = vsub.s32 0, %v29
    %v31 = vrot.slane %v26, %v30
    %33 = vmatprep.subr.mxu0 0.0
    %34 = vmatpush1.xpose.msra.mxu0 %v22
    %35 = vmatprep.subr.mxu0 0.0
    %36 = vmatpush1.xpose.msra.mxu0 %v23
    %37 = vmatprep.subr.mxu0 0.0
    %38 = vmatpush1.xpose.msra.mxu0 %v24
    %39 = vmatprep.subr.mxu0 0.0
    %40 = vmatpush1.xpose.msra.mxu0 %v25
    %41 = vmatprep.subr.mxu0 0.0
    %42 = vmatpush1.xpose.msra.mxu0 0.0
    %43 = vmatprep.subr.mxu0 0.0
    %44 = vmatpush1.xpose.msra.mxu0 0.0
    %45 = vmatprep.subr.mxu0 0.0
    %46 = vmatpush1.xpose.msra.mxu0 0.0
    %47 = vmatprep.subr.mxu0 0.0
    %48 = vmatpush1.xpose.msra.mxu0 0.0
    %49 = vmatprep.subr.mxu0 0.0
    %50 = vmatpush1.xpose.msra.mxu0 0.0
    %51 = vmatprep.subr.mxu0 0.0
    %52 = vmatpush1.xpose.msra.mxu0 0.0
    %53 = vmatprep.subr.mxu0 0.0
    %54 = vmatpush1.xpose.msra.mxu0 0.0
    %55 = vmatprep.subr.mxu0 0.0
    %56 = vmatpush1.xpose.msra.mxu0 0.0
    %57 = vmatprep.subr.mxu0 0.0
    %58 = vmatpush1.xpose.msra.mxu0 0.0
    %59 = vmatprep.subr.mxu0 0.0
    %60 = vmatpush1.xpose.msra.mxu0 0.0
    %61 = vmatprep.subr.mxu0 0.0
    %62 = vmatpush1.xpose.msra.mxu0 0.0
    %63 = vmatprep.subr.mxu0 0.0
    %64 = vmatpush1.xpose.msra.mxu0 0.0
    %65 = vmatprep.subr.mxu0 0.0
    %66 = vmatpush1.xpose.msra.mxu0 0.0
    %67 = vmatprep.subr.mxu0 0.0
    %68 = vmatpush1.xpose.msra.mxu0 0.0
    %69 = vmatprep.subr.mxu0 0.0
    %70 = vmatpush1.xpose.msra.mxu0 0.0
    %71 = vmatprep.subr.mxu0 0.0
    %72 = vmatpush1.xpose.msra.mxu0 0.0
    %73 = vmatprep.subr.mxu0 0.0
    %74 = vmatpush1.xpose.msra.mxu0 0.0
    %75 = vmatprep.subr.mxu0 0.0
    %76 = vmatpush1.xpose.msra.mxu0 0.0
    %77 = vmatprep.subr.mxu0 0.0
    %78 = vmatpush1.xpose.msra.mxu0 0.0
    %79 = vmatprep.subr.mxu0 0.0
    %80 = vmatpush1.xpose.msra.mxu0 0.0
    %81 = vmatprep.subr.mxu0 0.0
    %82 = vmatpush1.xpose.msra.mxu0 0.0
    %83 = vmatprep.subr.mxu0 0.0
    %84 = vmatpush1.xpose.msra.mxu0 0.0
    %85 = vmatprep.subr.mxu0 0.0
    %86 = vmatpush1.xpose.msra.mxu0 0.0
    %87 = vmatprep.subr.mxu0 0.0
    %88 = vmatpush1.xpose.msra.mxu0 0.0
    %89 = vmatprep.subr.mxu0 0.0
    %90 = vmatpush1.xpose.msra.mxu0 0.0
    %91 = vmatprep.subr.mxu0 0.0
    %92 = vmatpush1.xpose.msra.mxu0 0.0
    %93 = vmatprep.subr.mxu0 0.0
    %94 = vmatpush1.xpose.msra.mxu0 0.0
    %95 = vmatprep.subr.mxu0 0.0
    %96 = vmatpush1.xpose.msra.mxu0 0.0
    %97 = vmatprep.mubr.f32.mxu0 0.0
    %98 = vmatmul.mubr.f32.gmra.mrb[0].mxu0 %v21
    %v99 = vpop.f32.mrb[0].mxu0
    %v100 = vadd.f32 %v31, %v99
    %v101 = vpop.f32.mrb[0].mxu0
    %102 = vdwg.mxu0
    %v103 = vmax.f32 %v100, 0.0
    %v104 = vld [vmem:[%s3] sm:$0xff]
    %v105 = vld [vmem:[%s3 + $0x8] sm:$0xff]
    %v106 = vld [vmem:[%s3 + $0x10] sm:$0xff]
    %v107 = vld [vmem:[%s3 + $0x18] sm:$0xff]
    %v108 = vld [vmem:[%s3 + $0x20] sm:$0xff]
    %v109 = vld [vmem:[%s3 + $0x28] sm:$0xff]
    %v110 = vld [vmem:[%s3 + $0x30] sm:$0xff]
    %v111 = vld [vmem:[%s3 + $0x38] sm:$0xff]
    %v112 = vld [vmem:[%s3 + $0x40] sm:$0xff]
    %v113 = vld [vmem:[%s3 + $0x48] sm:$0xff]
    %v114 = vld [vmem:[%s3 + $0x50] sm:$0xff]
    %v115 = vld [vmem:[%s3 + $0x58] sm:$0xff]
    %v116 = vld [vmem:[%s3 + $0x60] sm:$0xff]
    %v117 = vld [vmem:[%s3 + $0x68] sm:$0xff]
    %v118 = vld [vmem:[%s3 + $0x70] sm:$0xff]
    %v119 = vld [vmem:[%s3 + $0x78] sm:$0xff]
    %v120 = vld [vmem:[%s4] sm:$0x1]
    %v122 = vlaneseq
    %v123 = vshrl.u32 %v122, 7
    %v124 = vsub.s32 0, %v123
    %v125 = vrot.slane %v120, %v124
    %vm127 = vcmask 261120
    %v129 = vsel %vm127, %v103, 0
    %v132 = vsel %vm127, %v104, 0
    %v135 = vsel %vm127, %v105, 0
    %v138 = vsel %vm127, %v106, 0
    %v141 = vsel %vm127, %v107, 0
    %v144 = vsel %vm127, %v108, 0
    %v147 = vsel %vm127, %v109, 0
    %v150 = vsel %vm127, %v110, 0
    %v153 = vsel %vm127, %v111, 0
    %v156 = vsel %vm127, %v112, 0
    %v159 = vsel %vm127, %v113, 0
    %v162 = vsel %vm127, %v114, 0
    %v165 = vsel %vm127, %v115, 0
    %v168 = vsel %vm127, %v116, 0
    %v171 = vsel %vm127, %v117, 0
    %v174 = vsel %vm127, %v118, 0
    %v177 = vsel %vm127, %v119, 0
    %179 = vmatprep.subr.mxu0 0.0
    %180 = vmatpush1.xpose.msra.mxu0 %v132
    %181 = vmatprep.subr.mxu0 0.0
    %182 = vmatpush1.xpose.msra.mxu0 %v135
    %183 = vmatprep.subr.mxu0 0.0
    %184 = vmatpush1.xpose.msra.mxu0 %v138
    %185 = vmatprep.subr.mxu0 0.0
    %186 = vmatpush1.xpose.msra.mxu0 %v141
    %187 = vmatprep.subr.mxu0 0.0
    %188 = vmatpush1.xpose.msra.mxu0 %v144
    %189 = vmatprep.subr.mxu0 0.0
    %190 = vmatpush1.xpose.msra.mxu0 %v147
    %191 = vmatprep.subr.mxu0 0.0
    %192 = vmatpush1.xpose.msra.mxu0 %v150
    %193 = vmatprep.subr.mxu0 0.0
    %194 = vmatpush1.xpose.msra.mxu0 %v153
    %195 = vmatprep.subr.mxu0 0.0
    %196 = vmatpush1.xpose.msra.mxu0 %v156
    %197 = vmatprep.subr.mxu0 0.0
    %198 = vmatpush1.xpose.msra.mxu0 %v159
    %199 = vmatprep.subr.mxu0 0.0
    %200 = vmatpush1.xpose.msra.mxu0 %v162
    %201 = vmatprep.subr.mxu0 0.0
    %202 = vmatpush1.xpose.msra.mxu0 %v165
    %203 = vmatprep.subr.mxu0 0.0
    %204 = vmatpush1.xpose.msra.mxu0 %v168
    %205 = vmatprep.subr.mxu0 0.0
    %206 = vmatpush1.xpose.msra.mxu0 %v171
    %207 = vmatprep.subr.mxu0 0.0
    %208 = vmatpush1.xpose.msra.mxu0 %v174
    %209 = vmatprep.subr.mxu0 0.0
    %210 = vmatpush1.xpose.msra.mxu0 %v177
    %211 = vmatprep.subr.mxu0 0.0
    %212 = vmatpush1.xpose.msra.mxu0 0.0
    %213 = vmatprep.subr.mxu0 0.0
    %214 = vmatpush1.xpose.msra.mxu0 0.0
    %215 = vmatprep.subr.mxu0 0.0
    %216 = vmatpush1.xpose.msra.mxu0 0.0
    %217 = vmatprep.subr.mxu0 0.0
    %218 = vmatpush1.xpose.msra.mxu0 0.0
    %219 = vmatprep.subr.mxu0 0.0
    %220 = vmatpush1.xpose.msra.mxu0 0.0
    %221 = vmatprep.subr.mxu0 0.0
    %222 = vmatpush1.xpose.msra.mxu0 0.0
    %223 = vmatprep.subr.mxu0 0.0
    %224 = vmatpush1.xpose.msra.mxu0 0.0
    %225 = vmatprep.subr.mxu0 0.0
    %226 = vmatpush1.xpose.msra.mxu0 0.0
    %227 = vmatprep.subr.mxu0 0.0
    %228 = vmatpush1.xpose.msra.mxu0 0.0
    %229 = vmatprep.subr.mxu0 0.0
    %230 = vmatpush1.xpose.msra.mxu0 0.0
    %231 = vmatprep.subr.mxu0 0.0
    %232 = vmatpush1.xpose.msra.mxu0 0.0
    %233 = vmatprep.subr.mxu0 0.0
    %234 = vmatpush1.xpose.msra.mxu0 0.0
    %235 = vmatprep.subr.mxu0 0.0
    %236 = vmatpush1.xpose.msra.mxu0 0.0
    %237 = vmatprep.subr.mxu0 0.0
    %238 = vmatpush1.xpose.msra.mxu0 0.0
    %239 = vmatprep.subr.mxu0 0.0
    %240 = vmatpush1.xpose.msra.mxu0 0.0
    %241 = vmatprep.subr.mxu0 0.0
    %242 = vmatpush1.xpose.msra.mxu0 0.0
    %243 = vmatprep.mubr.f32.mxu0 0.0
    %244 = vmatmul.mubr.f32.gmra.mrb[0].mxu0 %v129
    %v245 = vpop.f32.mrb[0].mxu0
    %v246 = vadd.f32 %v125, %v245
    %v247 = vpop.f32.mrb[0].mxu0
    %248 = vdwg.mxu0
    %v249 = vmax.f32 %v246, 0.0
    %250 = vst [vmem:[#allocation2] sm:$0xff] %v249
    // Predicated region
    $region22: #{tpu_custom_call.1} parent=1 // pred_check
      _
    $region23: #{tpu_custom_call.1} parent=1 // pred_check_branch
      %252 = sbr.rel (0) target = $region25
    $region24: #{tpu_custom_call.1} parent=1 // pred_region
      %s254 = ssub.s32 128, 128
      %255 = vsyncadd [#allocation3], %s254
      %s257 = sshll.u32 [#allocation2], 4
      %s258 = int_to_ptr.vmem [resolvable:$true] %s257
      %260 = dma.vmem_to_hbm [thread:$0]  %s258, 128, %s5, [#allocation3]
    $region25: #{tpu_custom_call.1} parent=1 // pred_fallthru
      _
    // Predicated region
    $region26: #{tpu_custom_call.1} parent=1 // pred_check
      _
    $region27: #{tpu_custom_call.1} parent=1 // pred_check_branch
      %262 = sbr.rel (0) target = $region29
    $region28: #{tpu_custom_call.1} parent=1 // pred_region
      %263 = dma.done [#allocation3], 128
    $region29: #{tpu_custom_call.1} parent=1 // pred_fallthru
      _
    %264 = vsyncpa [#allocation3], 1

</llo_original>
